<compile_context>
chip_gen: v7x
topology: tpu7x:2x2x1
jax: 0.10.0
libtpu: 0.0.40
codegen_flags: <defaults>
</compile_context>

<pallas_src>
import jax
import jax.numpy as jnp
from jax.experimental import pallas as pl
from jax.experimental.pallas import tpu as pltpu

LEAKY_SLOPE = 0.01            # nn.LeakyReLU() default negative_slope
BN_EPS = 1e-5                 # nn.BatchNorm1d default eps
LANE = 128
FUSED_VMEM_BUDGET = 44 << 20  # above this, fall back to the streamed path


def _round_up(x, m):
    return (x + m - 1) // m * m


def _leaky_relu(x):
    # mul + max (2 VPU ops) instead of cmp + mul + select.
    return jnp.maximum(x, LEAKY_SLOPE * x)


# ----------------------------- shared layer math -----------------------------

def _input_layer(x_f32, w_in_bf16, b_in_f32):
    """Linear + LeakyReLU; returns bf16 activation (MXU LHS for next layer)."""
    h = jnp.dot(x_f32.astype(jnp.bfloat16), w_in_bf16,
                preferred_element_type=jnp.float32) + b_in_f32
    return _leaky_relu(h).astype(jnp.bfloat16)


def _hidden_layer(h_bf16, w_bf16, bn3_f32):
    """Linear -> LeakyReLU -> BatchNorm1d (training-mode batch statistics).

    h_bf16: (batch, neurons) bf16.  w_bf16: (neurons, neurons) bf16.
    bn3_f32: (3, neurons) f32 rows = [linear bias, gamma, beta].
    Returns the next bf16 activation.
    """
    z = _leaky_relu(
        jnp.dot(h_bf16, w_bf16, preferred_element_type=jnp.float32)
        + bn3_f32[0:1])
    # Two-pass, biased variance (matches BatchNorm1d training forward).
    mean = jnp.mean(z, axis=0, keepdims=True)
    var = jnp.mean(jnp.square(z - mean), axis=0, keepdims=True)
    # Fold BN into one per-column scale/offset: h = z*a + b (rsqrt on EUP).
    a = bn3_f32[1:2] * jax.lax.rsqrt(var + BN_EPS)
    b = bn3_f32[2:3] - mean * a
    return (z * a + b).astype(jnp.bfloat16)


def _output_layer(h_bf16, w_out_bf16, b_out_f32):
    return jnp.dot(h_bf16, w_out_bf16,
                   preferred_element_type=jnp.float32) + b_out_f32


# --------------------------------- kernels -----------------------------------

def ff_fused_kernel(x_ref, w_in_ref, b_in_ref, w_h_ref, bn_ref,
                    w_out_ref, b_out_ref, out_ref):
    """Whole network in one invocation; w_h stack resident in VMEM."""
    n_hidden = w_h_ref.shape[0]
    h0 = _input_layer(x_ref[...], w_in_ref[...], b_in_ref[...])

    def body(k, h):
        return _hidden_layer(h, w_h_ref[k], bn_ref[k])

    h = jax.lax.fori_loop(0, n_hidden, body, h0, unroll=True)
    out_ref[...] = _output_layer(h, w_out_ref[...],
                                 b_out_ref[...]).astype(out_ref.dtype)


def ff_streamed_kernel(x_ref, w_in_ref, b_in_ref, w_h_ref, bn_ref,
                       w_out_ref, b_out_ref, out_ref, h_ref):
    """One grid step = one hidden layer; h_ref (bf16) resident across steps."""
    k = pl.program_id(0)

    @pl.when(k == 0)
    def _():
        h_ref[...] = _input_layer(x_ref[...], w_in_ref[...], b_in_ref[...])

    h_ref[...] = _hidden_layer(h_ref[...], w_h_ref[0], bn_ref[0])

    @pl.when(k == pl.num_programs(0) - 1)
    def _():
        out_ref[...] = _output_layer(h_ref[...], w_out_ref[...],
                                     b_out_ref[...]).astype(out_ref.dtype)


# --------------------------------- wrapper -----------------------------------

def _compiler_params(est_vmem_bytes, n_sequential_axes=0):
    kwargs = {}
    if n_sequential_axes:
        kwargs["dimension_semantics"] = ("arbitrary",) * n_sequential_axes
    if est_vmem_bytes > (32 << 20):
        # Raise the 32 MiB scoped default; stay below v7x's 64 MiB physical.
        # TODO(synk): on v6e (128 MiB physical VMEM) this could go to ~96 MiB.
        kwargs["vmem_limit_bytes"] = int(min(est_vmem_bytes + (8 << 20),
                                             60 << 20))
    return pltpu.CompilerParams(**kwargs)


def feedforward_nn(x, prep, force_streamed=False):
    """Forward pass. `prep` must come from prepare_params() (one-time cast)."""
    w_h = prep["w_h"]
    n_hidden, neurons, _ = w_h.shape
    assert n_hidden >= 1, "FeedForwardNN needs layers >= 2 (>= 1 hidden layer)"
    batch, in_dim = x.shape
    out_pad = prep["w_out"].shape[1]
    out_dim = prep["out_dim"]

    # VMEM footprint of everything except the hidden-weight stack.
    resident_bytes = (x.size * 4 + prep["w_in"].size * 2 + prep["b_in"].size * 4
                      + prep["w_out"].size * 2 + prep["b_out"].size * 4
                      + batch * out_pad * 4 + batch * neurons * 2)
    fused_bytes = resident_bytes + w_h.size * 2 + prep["bn"].size * 4

    if (not force_streamed) and fused_bytes <= FUSED_VMEM_BUDGET:
        out = pl.pallas_call(
            ff_fused_kernel,
            out_shape=jax.ShapeDtypeStruct((batch, out_pad), jnp.float32),
            compiler_params=_compiler_params(fused_bytes),
        )(x, prep["w_in"], prep["b_in"], w_h, prep["bn"],
          prep["w_out"], prep["b_out"])
    else:
        # Per-step footprint: residents + double-buffered w_h[k] / bn[k].
        streamed_bytes = (resident_bytes
                          + 2 * (neurons * neurons * 2 + 3 * neurons * 4))
        grid_spec = pltpu.PrefetchScalarGridSpec(
            num_scalar_prefetch=0,
            grid=(n_hidden,),
            in_specs=[
                pl.BlockSpec((batch, in_dim), lambda k: (0, 0)),           # x
                pl.BlockSpec((in_dim, neurons), lambda k: (0, 0)),         # w_in
                pl.BlockSpec((1, neurons), lambda k: (0, 0)),              # b_in
                pl.BlockSpec((1, neurons, neurons), lambda k: (k, 0, 0)),  # w_h[k]
                pl.BlockSpec((1, 3, neurons), lambda k: (k, 0, 0)),        # bn[k]
                pl.BlockSpec((neurons, out_pad), lambda k: (0, 0)),        # w_out
                pl.BlockSpec((1, out_pad), lambda k: (0, 0)),              # b_out
            ],
            out_specs=pl.BlockSpec((batch, out_pad), lambda k: (0, 0)),
            scratch_shapes=[pltpu.VMEM((batch, neurons), jnp.bfloat16)],   # h
        )
        out = pl.pallas_call(
            ff_streamed_kernel,
            out_shape=jax.ShapeDtypeStruct((batch, out_pad), jnp.float32),
            grid_spec=grid_spec,
            compiler_params=_compiler_params(streamed_bytes,
                                             n_sequential_axes=1),
        )(x, prep["w_in"], prep["b_in"], w_h, prep["bn"],
          prep["w_out"], prep["b_out"])

    return out[:, :out_dim]


# ------------------------------ parameters -----------------------------------

def init_params(key, input_dimension, output_dimension, layers, neurons):
    """Module-style f32 params; kaiming_uniform(a=0.01) weights, zero biases."""
    n_hidden = layers - 1

    def kaiming_uniform(k, fan_in, shape):
        a = 0.01
        bound = jnp.sqrt(6.0 / ((1.0 + a * a) * fan_in))
        return jax.random.uniform(k, shape, jnp.float32, -bound, bound)

    k_in, k_h, k_out = jax.random.split(key, 3)
    return {
        "w_in": kaiming_uniform(k_in, input_dimension,
                                (input_dimension, neurons)),
        "b_in": jnp.zeros((1, neurons), jnp.float32),
        "w_h": kaiming_uniform(k_h, neurons, (n_hidden, neurons, neurons)),
        "b_h": jnp.zeros((n_hidden, 1, neurons), jnp.float32),
        "gamma": jnp.ones((n_hidden, 1, neurons), jnp.float32),
        "beta": jnp.zeros((n_hidden, 1, neurons), jnp.float32),
        "w_out": kaiming_uniform(k_out, neurons, (neurons, output_dimension)),
        "b_out": jnp.zeros((1, output_dimension), jnp.float32),
    }


def prepare_params(params):
    """ONE-TIME conversion to the kernel layout (do NOT do this per call):
    bf16 matmul weights, packed BN params, output padded to a 128-lane slab."""
    neurons, out_dim = params["w_out"].shape
    out_pad = _round_up(out_dim, LANE)
    w_out = jnp.zeros((neurons, out_pad), jnp.bfloat16)
    w_out = w_out.at[:, :out_dim].set(params["w_out"].astype(jnp.bfloat16))
    b_out = jnp.zeros((1, out_pad), jnp.float32)
    b_out = b_out.at[:, :out_dim].set(params["b_out"])
    # rows: [linear bias, gamma, beta] per hidden layer.
    bn = jnp.concatenate([params["b_h"], params["gamma"], params["beta"]],
                         axis=1)
    return {
        "w_in": params["w_in"].astype(jnp.bfloat16),
        "b_in": params["b_in"],
        "w_h": params["w_h"].astype(jnp.bfloat16),
        "bn": bn,                                  # (n_hidden, 3, neurons) f32
        "w_out": w_out,
        "b_out": b_out,
        "out_dim": out_dim,
    }


# ------------------------------- reference -----------------------------------

def reference_forward(x, params, matmul_dtype=jnp.float32):
    """Pure-JAX reference. matmul_dtype=bf16 mirrors the kernel's MXU casts."""
    def dot(a, b):
        return jnp.dot(a.astype(matmul_dtype), b.astype(matmul_dtype),
                       preferred_element_type=jnp.float32)

    h = _leaky_relu(dot(x, params["w_in"]) + params["b_in"])
    for k in range(params["w_h"].shape[0]):
        z = _leaky_relu(dot(h, params["w_h"][k]) + params["b_h"][k])
        mean = jnp.mean(z, axis=0, keepdims=True)
        var = jnp.mean((z - mean) ** 2, axis=0, keepdims=True)   # biased var
        h = params["gamma"][k] * (z - mean) * jax.lax.rsqrt(var + BN_EPS) \
            + params["beta"][k]
    return dot(h, params["w_out"]) + params["b_out"]


if __name__ == "__main__":
    # FeedForwardNN(input_dimension=16, output_dimension=8, layers=3, neurons=128)
    # => input layer + 2 hidden(+BN) layers + output layer; batch=8.
    batch, input_dimension, output_dimension = 8, 16, 8
    layers, neurons = 3, 128

    key = jax.random.PRNGKey(0)
    kx, kp = jax.random.split(key)
    x = jax.random.normal(kx, (batch, input_dimension), jnp.float32)
    params = init_params(kp, input_dimension, output_dimension, layers, neurons)
    prep = prepare_params(params)          # one-time bf16 cast / pack / pad

    # Fused path (default at this size).
    out = jax.block_until_ready(feedforward_nn(x, prep))
    assert out.shape == (batch, output_dimension)

    ref_mixed = reference_forward(x, params, matmul_dtype=jnp.bfloat16)
    ref_f32 = reference_forward(x, params, matmul_dtype=jnp.float32)
    assert jnp.allclose(out, ref_mixed, atol=2e-3, rtol=2e-3)
    assert jnp.allclose(out, ref_f32, atol=1e-1, rtol=1e-1)

    # Also exercise the streamed (grid=(n_hidden,)) path used for large nets.
    out_s = jax.block_until_ready(feedforward_nn(x, prep, force_streamed=True))
    assert out_s.shape == (batch, output_dimension)
    assert jnp.allclose(out_s, ref_mixed, atol=2e-3, rtol=2e-3)

    print("KERNEL_OK")
</pallas_src>

<mosaic_0001>
module attributes {stable_mosaic.version = 11 : i64} {
  func.func @ff_fused_kernel(%arg0: memref<8x16xf32, #tpu.memory_space<vmem>>, %arg1: memref<16x128xbf16, #tpu.memory_space<vmem>>, %arg2: memref<1x128xf32, #tpu.memory_space<vmem>>, %arg3: memref<2x128x128xbf16, #tpu.memory_space<vmem>>, %arg4: memref<2x3x128xf32, #tpu.memory_space<vmem>>, %arg5: memref<128x128xbf16, #tpu.memory_space<vmem>>, %arg6: memref<1x128xf32, #tpu.memory_space<vmem>>, %arg7: memref<8x128xf32, #tpu.memory_space<vmem>>) attributes {dimension_semantics = [], scalar_prefetch = 0 : i64, scratch_operands = 0 : i64, tpu.core_type = #tpu.core_type<tc>} {
    %c0 = arith.constant 0 : index
    %c0_0 = arith.constant 0 : index
    %0 = vector.load %arg0[%c0, %c0_0] : memref<8x16xf32, #tpu.memory_space<vmem>>, vector<8x16xf32>
    %c0_1 = arith.constant 0 : index
    %c0_2 = arith.constant 0 : index
    %1 = vector.load %arg1[%c0_1, %c0_2] : memref<16x128xbf16, #tpu.memory_space<vmem>>, vector<16x128xbf16>
    %c0_3 = arith.constant 0 : index
    %c0_4 = arith.constant 0 : index
    %2 = vector.load %arg2[%c0_3, %c0_4] : memref<1x128xf32, #tpu.memory_space<vmem>>, vector<1x128xf32>
    %3 = arith.truncf %0 : vector<8x16xf32> to vector<8x16xbf16>
    %cst = arith.constant dense<0.000000e+00> : vector<8x128xf32>
    %4 = tpu.matmul %3, %1, %cst {dimension_numbers = #tpu.dot_dimension_numbers<[1], [0], [0], [1], [0, 0, 1, 1], [], []>} : vector<8x16xbf16>, vector<16x128xbf16>, vector<8x128xf32> -> vector<8x128xf32>
    %5 = vector.broadcast %2 : vector<1x128xf32> to vector<8x128xf32>
    %6 = arith.addf %4, %5 : vector<8x128xf32>
    %cst_5 = arith.constant 0.00999999977 : f32
    %7 = vector.broadcast %cst_5 : f32 to vector<8x128xf32>
    %8 = arith.mulf %7, %6 : vector<8x128xf32>
    %9 = arith.maximumf %6, %8 : vector<8x128xf32>
    %10 = arith.truncf %9 : vector<8x128xf32> to vector<8x128xbf16>
    %c0_i32 = arith.constant 0 : i32
    %11 = arith.index_cast %c0_i32 : i32 to index
    %c0_6 = arith.constant 0 : index
    %c0_7 = arith.constant 0 : index
    %12 = vector.load %arg3[%11, %c0_6, %c0_7] : memref<2x128x128xbf16, #tpu.memory_space<vmem>>, vector<1x128x128xbf16>
    %13 = vector.shape_cast %12 : vector<1x128x128xbf16> to vector<128x128xbf16>
    %14 = arith.index_cast %c0_i32 : i32 to index
    %c0_8 = arith.constant 0 : index
    %c0_9 = arith.constant 0 : index
    %15 = vector.load %arg4[%14, %c0_8, %c0_9] : memref<2x3x128xf32, #tpu.memory_space<vmem>>, vector<1x3x128xf32>
    %16 = vector.shape_cast %15 : vector<1x3x128xf32> to vector<3x128xf32>
    %cst_10 = arith.constant dense<0.000000e+00> : vector<8x128xf32>
    %17 = tpu.matmul %10, %13, %cst_10 {dimension_numbers = #tpu.dot_dimension_numbers<[1], [0], [0], [1], [0, 0, 1, 1], [], []>} : vector<8x128xbf16>, vector<128x128xbf16>, vector<8x128xf32> -> vector<8x128xf32>
    %18 = vector.extract_strided_slice %16 {offsets = [0, 0], sizes = [1, 128], strides = [1, 1]} : vector<3x128xf32> to vector<1x128xf32>
    %19 = vector.broadcast %18 : vector<1x128xf32> to vector<8x128xf32>
    %20 = arith.addf %17, %19 : vector<8x128xf32>
    %cst_11 = arith.constant 0.00999999977 : f32
    %21 = vector.broadcast %cst_11 : f32 to vector<8x128xf32>
    %22 = arith.mulf %21, %20 : vector<8x128xf32>
    %23 = arith.maximumf %20, %22 : vector<8x128xf32>
    %cst_12 = arith.constant dense<0.000000e+00> : vector<128xf32>
    %24 = vector.multi_reduction <add>, %23, %cst_12 [0] : vector<8x128xf32> to vector<128xf32>
    %25 = vector.shape_cast %24 : vector<128xf32> to vector<1x128xf32>
    %cst_13 = arith.constant 8.000000e+00 : f32
    %26 = vector.broadcast %cst_13 : f32 to vector<1x128xf32>
    %27 = arith.divf %25, %26 : vector<1x128xf32>
    %28 = vector.broadcast %27 : vector<1x128xf32> to vector<8x128xf32>
    %29 = arith.subf %23, %28 : vector<8x128xf32>
    %30 = arith.mulf %29, %29 : vector<8x128xf32>
    %cst_14 = arith.constant dense<0.000000e+00> : vector<128xf32>
    %31 = vector.multi_reduction <add>, %30, %cst_14 [0] : vector<8x128xf32> to vector<128xf32>
    %32 = vector.shape_cast %31 : vector<128xf32> to vector<1x128xf32>
    %cst_15 = arith.constant 8.000000e+00 : f32
    %33 = vector.broadcast %cst_15 : f32 to vector<1x128xf32>
    %34 = arith.divf %32, %33 : vector<1x128xf32>
    %35 = vector.extract_strided_slice %16 {offsets = [1, 0], sizes = [1, 128], strides = [1, 1]} : vector<3x128xf32> to vector<1x128xf32>
    %cst_16 = arith.constant 9.99999974E-6 : f32
    %36 = vector.broadcast %cst_16 : f32 to vector<1x128xf32>
    %37 = arith.addf %34, %36 : vector<1x128xf32>
    %38 = math.rsqrt %37 : vector<1x128xf32>
    %39 = arith.mulf %35, %38 : vector<1x128xf32>
    %40 = vector.extract_strided_slice %16 {offsets = [2, 0], sizes = [1, 128], strides = [1, 1]} : vector<3x128xf32> to vector<1x128xf32>
    %41 = arith.mulf %27, %39 : vector<1x128xf32>
    %42 = arith.subf %40, %41 : vector<1x128xf32>
    %43 = vector.broadcast %39 : vector<1x128xf32> to vector<8x128xf32>
    %44 = arith.mulf %23, %43 : vector<8x128xf32>
    %45 = vector.broadcast %42 : vector<1x128xf32> to vector<8x128xf32>
    %46 = arith.addf %44, %45 : vector<8x128xf32>
    %47 = arith.truncf %46 : vector<8x128xf32> to vector<8x128xbf16>
    %c1_i32 = arith.constant 1 : i32
    %48 = arith.index_cast %c1_i32 : i32 to index
    %c0_17 = arith.constant 0 : index
    %c0_18 = arith.constant 0 : index
    %49 = vector.load %arg3[%48, %c0_17, %c0_18] : memref<2x128x128xbf16, #tpu.memory_space<vmem>>, vector<1x128x128xbf16>
    %50 = vector.shape_cast %49 : vector<1x128x128xbf16> to vector<128x128xbf16>
    %51 = arith.index_cast %c1_i32 : i32 to index
    %c0_19 = arith.constant 0 : index
    %c0_20 = arith.constant 0 : index
    %52 = vector.load %arg4[%51, %c0_19, %c0_20] : memref<2x3x128xf32, #tpu.memory_space<vmem>>, vector<1x3x128xf32>
    %53 = vector.shape_cast %52 : vector<1x3x128xf32> to vector<3x128xf32>
    %cst_21 = arith.constant dense<0.000000e+00> : vector<8x128xf32>
    %54 = tpu.matmul %47, %50, %cst_21 {dimension_numbers = #tpu.dot_dimension_numbers<[1], [0], [0], [1], [0, 0, 1, 1], [], []>} : vector<8x128xbf16>, vector<128x128xbf16>, vector<8x128xf32> -> vector<8x128xf32>
    %55 = vector.extract_strided_slice %53 {offsets = [0, 0], sizes = [1, 128], strides = [1, 1]} : vector<3x128xf32> to vector<1x128xf32>
    %56 = vector.broadcast %55 : vector<1x128xf32> to vector<8x128xf32>
    %57 = arith.addf %54, %56 : vector<8x128xf32>
    %cst_22 = arith.constant 0.00999999977 : f32
    %58 = vector.broadcast %cst_22 : f32 to vector<8x128xf32>
    %59 = arith.mulf %58, %57 : vector<8x128xf32>
    %60 = arith.maximumf %57, %59 : vector<8x128xf32>
    %cst_23 = arith.constant dense<0.000000e+00> : vector<128xf32>
    %61 = vector.multi_reduction <add>, %60, %cst_23 [0] : vector<8x128xf32> to vector<128xf32>
    %62 = vector.shape_cast %61 : vector<128xf32> to vector<1x128xf32>
    %cst_24 = arith.constant 8.000000e+00 : f32
    %63 = vector.broadcast %cst_24 : f32 to vector<1x128xf32>
    %64 = arith.divf %62, %63 : vector<1x128xf32>
    %65 = vector.broadcast %64 : vector<1x128xf32> to vector<8x128xf32>
    %66 = arith.subf %60, %65 : vector<8x128xf32>
    %67 = arith.mulf %66, %66 : vector<8x128xf32>
    %cst_25 = arith.constant dense<0.000000e+00> : vector<128xf32>
    %68 = vector.multi_reduction <add>, %67, %cst_25 [0] : vector<8x128xf32> to vector<128xf32>
    %69 = vector.shape_cast %68 : vector<128xf32> to vector<1x128xf32>
    %cst_26 = arith.constant 8.000000e+00 : f32
    %70 = vector.broadcast %cst_26 : f32 to vector<1x128xf32>
    %71 = arith.divf %69, %70 : vector<1x128xf32>
    %72 = vector.extract_strided_slice %53 {offsets = [1, 0], sizes = [1, 128], strides = [1, 1]} : vector<3x128xf32> to vector<1x128xf32>
    %cst_27 = arith.constant 9.99999974E-6 : f32
    %73 = vector.broadcast %cst_27 : f32 to vector<1x128xf32>
    %74 = arith.addf %71, %73 : vector<1x128xf32>
    %75 = math.rsqrt %74 : vector<1x128xf32>
    %76 = arith.mulf %72, %75 : vector<1x128xf32>
    %77 = vector.extract_strided_slice %53 {offsets = [2, 0], sizes = [1, 128], strides = [1, 1]} : vector<3x128xf32> to vector<1x128xf32>
    %78 = arith.mulf %64, %76 : vector<1x128xf32>
    %79 = arith.subf %77, %78 : vector<1x128xf32>
    %80 = vector.broadcast %76 : vector<1x128xf32> to vector<8x128xf32>
    %81 = arith.mulf %60, %80 : vector<8x128xf32>
    %82 = vector.broadcast %79 : vector<1x128xf32> to vector<8x128xf32>
    %83 = arith.addf %81, %82 : vector<8x128xf32>
    %84 = arith.truncf %83 : vector<8x128xf32> to vector<8x128xbf16>
    %c2_i32 = arith.constant 2 : i32
    %c0_28 = arith.constant 0 : index
    %c0_29 = arith.constant 0 : index
    %85 = vector.load %arg5[%c0_28, %c0_29] : memref<128x128xbf16, #tpu.memory_space<vmem>>, vector<128x128xbf16>
    %c0_30 = arith.constant 0 : index
    %c0_31 = arith.constant 0 : index
    %86 = vector.load %arg6[%c0_30, %c0_31] : memref<1x128xf32, #tpu.memory_space<vmem>>, vector<1x128xf32>
    %cst_32 = arith.constant dense<0.000000e+00> : vector<8x128xf32>
    %87 = tpu.matmul %84, %85, %cst_32 {dimension_numbers = #tpu.dot_dimension_numbers<[1], [0], [0], [1], [0, 0, 1, 1], [], []>} : vector<8x128xbf16>, vector<128x128xbf16>, vector<8x128xf32> -> vector<8x128xf32>
    %88 = vector.broadcast %86 : vector<1x128xf32> to vector<8x128xf32>
    %89 = arith.addf %87, %88 : vector<8x128xf32>
    %c0_33 = arith.constant 0 : index
    %c0_34 = arith.constant 0 : index
    %90 = vector.load %arg7[%c0_33, %c0_34] : memref<8x128xf32, #tpu.memory_space<vmem>>, vector<8x128xf32>
    tpu.vector_store %arg7[%c0_33, %c0_34], %89 {strides = array<i32>} : memref<8x128xf32, #tpu.memory_space<vmem>>, vector<8x128xf32>,
    return
  }
}

</mosaic_0001>

<llo_original>
// kernel: tpu_custom_call.1
$region0: #{tpu_custom_call.1}
  #allocation0 [shape = 'u32[]', space=smem, size = 0x4, offset = 0x4, fixed_abs, tag = 'smem constant byte address 0x4 - core index']
  #allocation1 [shape = 'u32[144,128]{1,0:T(1,128)}', space=vmem, size = 0x12000, scoped, tag = 'internal scratch']
  %s0 = inlined_call_operand.vmem [shape: f32[8,16], index: 0, kind: input, shape index: {}]
  %s1 = inlined_call_operand.vmem [shape: bf16[16,128], index: 1, kind: input, shape index: {}]
  %s2 = inlined_call_operand.vmem [shape: f32[1,128], index: 2, kind: input, shape index: {}]
  %s3 = inlined_call_operand.hbm [shape: bf16[2,128,128], index: 3, kind: input, shape index: {}]
  %s4 = inlined_call_operand.vmem [shape: f32[2,3,128], index: 4, kind: input, shape index: {}]
  %s5 = inlined_call_operand.hbm [shape: bf16[128,128], index: 5, kind: input, shape index: {}]
  %s6 = inlined_call_operand.vmem [shape: f32[1,128], index: 6, kind: input, shape index: {}]
  %s7 = inlined_call_operand.hbm [shape: f32[8,128], index: 7, kind: output, shape index: {}]
  %s8 = sld [smem:[#allocation0]]
  $region46: #{tpu_custom_call.1} parent=0
    _
  %s10 = ssub.s32 1, %s8
  %s11 = scalar_select 0, %s10, %s8
  $region1: #{tpu_custom_call.1} parent=0
    #allocation2 [shape = 'u8[65536]{0}', space=vmem, size = 0x10000, scoped, tag = 'input window, operand 3, single buffered']
    #allocation3 [shape = 's32[1]{0}', space=sflag, size = 0x4, scoped, tag = 'scoped memory for tpu_custom_call.1']
    #allocation4 [shape = 's32[1]{0}', space=sflag, size = 0x4, scoped, tag = 'scoped memory for tpu_custom_call.1']
    #allocation5 [shape = 'u8[32768]{0}', space=vmem, size = 0x8000, scoped, tag = 'input window, operand 5, single buffered']
    #allocation6 [shape = 's32[1]{0}', space=sflag, size = 0x4, scoped, tag = 'scoped memory for tpu_custom_call.1']
    #allocation7 [shape = 'u8[4096]{0}', space=vmem, size = 0x1000, scoped, tag = 'output window, operand 0, single buffered']
    %12 = vsyncpa [#allocation3], 0
    %13 = vsyncpa [#allocation6], 0
    %14 = vsyncpa [#allocation4], 0
    // Predicated region
    $region2: #{tpu_custom_call.1} parent=1 // pred_check
      _
    $region3: #{tpu_custom_call.1} parent=1 // pred_check_branch
      %16 = sbr.rel (0) target = $region5
    $region4: #{tpu_custom_call.1} parent=1 // pred_region
      _
    $region5: #{tpu_custom_call.1} parent=1 // pred_fallthru
      _
    // Predicated region
    $region6: #{tpu_custom_call.1} parent=1 // pred_check
      _
    $region7: #{tpu_custom_call.1} parent=1 // pred_check_branch
      %18 = sbr.rel (0) target = $region9
    $region8: #{tpu_custom_call.1} parent=1 // pred_region
      _
    $region9: #{tpu_custom_call.1} parent=1 // pred_fallthru
      _
    // Predicated region
    $region10: #{tpu_custom_call.1} parent=1 // pred_check
      _
    $region11: #{tpu_custom_call.1} parent=1 // pred_check_branch
      %20 = sbr.rel (0) target = $region13
    $region12: #{tpu_custom_call.1} parent=1 // pred_region
      _
    $region13: #{tpu_custom_call.1} parent=1 // pred_fallthru
      _
    // Predicated region
    $region14: #{tpu_custom_call.1} parent=1 // pred_check
      _
    $region15: #{tpu_custom_call.1} parent=1 // pred_check_branch
      %22 = sbr.rel (0) target = $region17
    $region16: #{tpu_custom_call.1} parent=1 // pred_region
      %s24 = ssub.s32 2048, 2048
      %25 = vsyncadd [#allocation3], %s24
      %s26 = sshll.u32 [#allocation2], 4
      %s27 = int_to_ptr.vmem [resolvable:$true] %s26
      %32 = dma.hbm_to_vmem [thread:$0]  %s3, 2048, %s27, [#allocation3], 64, 64, 4
    $region17: #{tpu_custom_call.1} parent=1 // pred_fallthru
      _
    // Predicated region
    $region18: #{tpu_custom_call.1} parent=1 // pred_check
      _
    $region19: #{tpu_custom_call.1} parent=1 // pred_check_branch
      %34 = sbr.rel (0) target = $region21
    $region20: #{tpu_custom_call.1} parent=1 // pred_region
      _
    $region21: #{tpu_custom_call.1} parent=1 // pred_fallthru
      _
    // Predicated region
    $region22: #{tpu_custom_call.1} parent=1 // pred_check
      _
    $region23: #{tpu_custom_call.1} parent=1 // pred_check_branch
      %36 = sbr.rel (0) target = $region25
    $region24: #{tpu_custom_call.1} parent=1 // pred_region
      %s38 = ssub.s32 1024, 1024
      %39 = vsyncadd [#allocation6], %s38
      %s40 = sshll.u32 [#allocation5], 4
      %s41 = int_to_ptr.vmem [resolvable:$true] %s40
      %46 = dma.hbm_to_vmem [thread:$0]  %s5, 1024, %s41, [#allocation6], 64, 64, 4
    $region25: #{tpu_custom_call.1} parent=1 // pred_fallthru
      _
    // Predicated region
    $region26: #{tpu_custom_call.1} parent=1 // pred_check
      _
    $region27: #{tpu_custom_call.1} parent=1 // pred_check_branch
      %48 = sbr.rel (0) target = $region29
    $region28: #{tpu_custom_call.1} parent=1 // pred_region
      _
    $region29: #{tpu_custom_call.1} parent=1 // pred_fallthru
      _
    // Predicated region
    $region30: #{tpu_custom_call.1} parent=1 // pred_check
      _
    $region31: #{tpu_custom_call.1} parent=1 // pred_check_branch
      %50 = sbr.rel (0) target = $region33
    $region32: #{tpu_custom_call.1} parent=1 // pred_region
      %51 = dma.done [#allocation3], 2048
    $region33: #{tpu_custom_call.1} parent=1 // pred_fallthru
      _
    // Predicated region
    $region34: #{tpu_custom_call.1} parent=1 // pred_check
      _
    $region35: #{tpu_custom_call.1} parent=1 // pred_check_branch
      %53 = sbr.rel (0) target = $region37
    $region36: #{tpu_custom_call.1} parent=1 // pred_region
      %54 = dma.done [#allocation6], 1024
    $region37: #{tpu_custom_call.1} parent=1 // pred_fallthru
      _
    %v56 = vld [vmem:[%s0] sm:$0xff]
    %v57 = vld [vmem:[%s1] sm:$0xf]
    %v58 = vld [vmem:[%s1 + $0x4] sm:$0xf]
    %v59 = vld [vmem:[%s2] sm:$0x1]
    %v60 = vpack.c.bf16 %v56, %v56
    %v62 = vlaneseq
    %v63 = vshrl.u32 %v62, 7
    %v64 = vsub.s32 0, %v63
    %v65 = vrot.slane %v59, %v64
    %v69 = vunpack.c.l.b16 %v57
    %v70 = vunpack.c.l.b16 %v58
    %v71 = vpack.c.b16 %v70, %v69
    %vm73 = vcmask 130048
    %v75 = vsel %vm73, %v60, 0
    %77 = vmatprep.subr.bf16.mxu0 0
    %78 = vmatpush1.bf16.msra.mxu0 %v71
    %79 = vmatprep.subr.bf16.mxu0 0
    %80 = vmatpush1.bf16.msra.mxu0 0
    %81 = vmatprep.subr.bf16.mxu0 0
    %82 = vmatpush1.bf16.msra.mxu0 0
    %83 = vmatprep.subr.bf16.mxu0 0
    %84 = vmatpush1.bf16.msra.mxu0 0
    %85 = vmatprep.subr.bf16.mxu0 0
    %86 = vmatpush1.bf16.msra.mxu0 0
    %87 = vmatprep.subr.bf16.mxu0 0
    %88 = vmatpush1.bf16.msra.mxu0 0
    %89 = vmatprep.subr.bf16.mxu0 0
    %90 = vmatpush1.bf16.msra.mxu0 0
    %91 = vmatprep.subr.bf16.mxu0 0
    %92 = vmatpush1.bf16.msra.mxu0 0
    %93 = vmatprep.subr.bf16.mxu0 0
    %94 = vmatpush1.bf16.msra.mxu0 0
    %95 = vmatprep.subr.bf16.mxu0 0
    %96 = vmatpush1.bf16.msra.mxu0 0
    %97 = vmatprep.subr.bf16.mxu0 0
    %98 = vmatpush1.bf16.msra.mxu0 0
    %99 = vmatprep.subr.bf16.mxu0 0
    %100 = vmatpush1.bf16.msra.mxu0 0
    %101 = vmatprep.subr.bf16.mxu0 0
    %102 = vmatpush1.bf16.msra.mxu0 0
    %103 = vmatprep.subr.bf16.mxu0 0
    %104 = vmatpush1.bf16.msra.mxu0 0
    %105 = vmatprep.subr.bf16.mxu0 0
    %106 = vmatpush1.bf16.msra.mxu0 0
    %107 = vmatprep.subr.bf16.mxu0 0
    %108 = vmatpush1.bf16.msra.mxu0 0
    %109 = vmatprep.mubr.bf16.mxu0 0
    %110 = vmatmul.mubr.bf16.gmra.mrb[0].mxu0 %v75
    %v111 = vpop.f32.mrb[0].mxu0
    %v112 = vadd.f32 %v65, %v111
    %v113 = vpop.f32.mrb[0].mxu0
    %v114 = vpop.f32.mrb[0].mxu0
    %v115 = vpop.f32.mrb[0].mxu0
    %116 = vdwg.mxu0
    %v117 = vmul.f32 %v112, 0.01
    %v118 = vmax.f32 %v112, %v117
    %v119 = vpack.c.bf16 %v118, %v118
    %v120 = vld [vmem:[#allocation2] sm:$0xf]
    %v121 = vld [vmem:[#allocation2 + $0x4] sm:$0xf]
    %v122 = vld [vmem:[#allocation2 + $0x8] sm:$0xf]
    %v123 = vld [vmem:[#allocation2 + $0xc] sm:$0xf]
    %v124 = vld [vmem:[#allocation2 + $0x10] sm:$0xf]
    %v125 = vld [vmem:[#allocation2 + $0x14] sm:$0xf]
    %v126 = vld [vmem:[#allocation2 + $0x18] sm:$0xf]
    %v127 = vld [vmem:[#allocation2 + $0x1c] sm:$0xf]
    %v128 = vld [vmem:[#allocation2 + $0x20] sm:$0xf]
    %v129 = vld [vmem:[#allocation2 + $0x24] sm:$0xf]
    %v130 = vld [vmem:[#allocation2 + $0x28] sm:$0xf]
    %v131 = vld [vmem:[#allocation2 + $0x2c] sm:$0xf]
    %v132 = vld [vmem:[#allocation2 + $0x30] sm:$0xf]
    %v133 = vld [vmem:[#allocation2 + $0x34] sm:$0xf]
    %v134 = vld [vmem:[#allocation2 + $0x38] sm:$0xf]
    %v135 = vld [vmem:[#allocation2 + $0x3c] sm:$0xf]
    %v136 = vld [vmem:[%s4] sm:$0x7]
    %v137 = vlaneseq
    %v138 = vshrl.u32 %v137, 7
    %v139 = vsub.s32 0, %v138
    %v140 = vrot.slane %v136, %v139
    %v157 = vunpack.c.l.b16 %v120
    %v158 = vunpack.c.l.b16 %v121
    %v159 = vunpack.c.l.b16 %v122
    %v160 = vunpack.c.l.b16 %v123
    %v161 = vunpack.c.l.b16 %v124
    %v162 = vunpack.c.l.b16 %v125
    %v163 = vunpack.c.l.b16 %v126
    %v164 = vunpack.c.l.b16 %v127
    %v165 = vunpack.c.l.b16 %v128
    %v166 = vunpack.c.l.b16 %v129
    %v167 = vunpack.c.l.b16 %v130
    %v168 = vunpack.c.l.b16 %v131
    %v169 = vunpack.c.l.b16 %v132
    %v170 = vunpack.c.l.b16 %v133
    %v171 = vunpack.c.l.b16 %v134
    %v172 = vunpack.c.l.b16 %v135
    %v173 = vpack.c.b16 %v158, %v157
    %v174 = vpack.c.b16 %v160, %v159
    %v175 = vpack.c.b16 %v162, %v161
    %v176 = vpack.c.b16 %v164, %v163
    %v177 = vpack.c.b16 %v166, %v165
    %v178 = vpack.c.b16 %v168, %v167
    %v179 = vpack.c.b16 %v170, %v169
    %v180 = vpack.c.b16 %v172, %v171
    %189 = vmatprep.subr.bf16.mxu0 0
    %190 = vmatpush1.bf16.msra.mxu0 %v173
    %191 = vmatprep.subr.bf16.mxu0 0
    %192 = vmatpush1.bf16.msra.mxu0 %v174
    %193 = vmatprep.subr.bf16.mxu0 0
    %194 = vmatpush1.bf16.msra.mxu0 %v175
    %195 = vmatprep.subr.bf16.mxu0 0
    %196 = vmatpush1.bf16.msra.mxu0 %v176
    %197 = vmatprep.subr.bf16.mxu0 0
    %198 = vmatpush1.bf16.msra.mxu0 %v177
    %199 = vmatprep.subr.bf16.mxu0 0
    %200 = vmatpush1.bf16.msra.mxu0 %v178
    %201 = vmatprep.subr.bf16.mxu0 0
    %202 = vmatpush1.bf16.msra.mxu0 %v179
    %203 = vmatprep.subr.bf16.mxu0 0
    %204 = vmatpush1.bf16.msra.mxu0 %v180
    %205 = vmatprep.subr.bf16.mxu0 0
    %206 = vmatpush1.bf16.msra.mxu0 0
    %207 = vmatprep.subr.bf16.mxu0 0
    %208 = vmatpush1.bf16.msra.mxu0 0
    %209 = vmatprep.subr.bf16.mxu0 0
    %210 = vmatpush1.bf16.msra.mxu0 0
    %211 = vmatprep.subr.bf16.mxu0 0
    %212 = vmatpush1.bf16.msra.mxu0 0
    %213 = vmatprep.subr.bf16.mxu0 0
    %214 = vmatpush1.bf16.msra.mxu0 0
    %215 = vmatprep.subr.bf16.mxu0 0
    %216 = vmatpush1.bf16.msra.mxu0 0
    %217 = vmatprep.subr.bf16.mxu0 0
    %218 = vmatpush1.bf16.msra.mxu0 0
    %219 = vmatprep.subr.bf16.mxu0 0
    %220 = vmatpush1.bf16.msra.mxu0 0
    %221 = vmatprep.mubr.bf16.mxu0 0
    %222 = vmatmul.mubr.bf16.gmra.mrb[0].mxu0 %v119
    %v223 = vpop.f32.mrb[0].mxu0
    %v224 = vadd.f32 %v140, %v223
    %v225 = vpop.f32.mrb[0].mxu0
    %v226 = vpop.f32.mrb[0].mxu0
    %v227 = vpop.f32.mrb[0].mxu0
    %228 = vdwg.mxu0
    %v229 = vmul.f32 %v224, 0.01
    %v230 = vmax.f32 %v224, %v229
    %v231 = vrot.slane %v230, 4
    %v232 = vadd.f32 %v230, %v231
    %v233 = vrot.slane %v232, 2
    %v234 = vadd.f32 %v232, %v233
    %v235 = vrot.slane %v234, 1
    %v236 = vadd.f32 %v234, %v235
    %v237 = vrcp.pop 8.0
    %v238 = vmul.f32 %v236, %v237
    %v239 = vsub.f32 %v230, %v238
    %v240 = vmul.f32 %v239, %v239
    %v241 = vrot.slane %v240, 4
    %v242 = vadd.f32 %v240, %v241
    %v243 = vrot.slane %v242, 2
    %v244 = vadd.f32 %v242, %v243
    %v245 = vrot.slane %v244, 1
    %v246 = vadd.f32 %v244, %v245
    %v247 = vmul.f32 %v246, %v237
    %v248 = vadd.f32 %v247, 1e-05
    %v249 = vrsqrt.pop %v248
    %v250 = vmul.f32 %v136, %v249
    %v251 = vmul.f32 %v238, %v250
    %v253 = vrot.slane %v251, 7
    %v255 = vsub.f32 %v136, %v253
    %v256 = vlaneseq
    %v257 = vshrl.u32 %v256, 7
    %v258 = vsub.s32 1, %v257
    %v259 = vrot.slane %v250, %v258
    %v260 = vmul.f32 %v230, %v259
    %v261 = vlaneseq
    %v262 = vshrl.u32 %v261, 7
    %v263 = vsub.s32 2, %v262
    %v264 = vrot.slane %v255, %v263
    %v265 = vadd.f32 %v260, %v264
    %v266 = vpack.c.bf16 %v265, %v265
    %s267 = scalar_lea.vmem [#allocation2], 64
    %v268 = vld [vmem:[%s267] sm:$0xf]
    %v269 = vld [vmem:[%s267 + $0x4] sm:$0xf]
    %v270 = vld [vmem:[%s267 + $0x8] sm:$0xf]
    %v271 = vld [vmem:[%s267 + $0xc] sm:$0xf]
    %v272 = vld [vmem:[%s267 + $0x10] sm:$0xf]
    %v273 = vld [vmem:[%s267 + $0x14] sm:$0xf]
    %v274 = vld [vmem:[%s267 + $0x18] sm:$0xf]
    %v275 = vld [vmem:[%s267 + $0x1c] sm:$0xf]
    %v276 = vld [vmem:[%s267 + $0x20] sm:$0xf]
    %v277 = vld [vmem:[%s267 + $0x24] sm:$0xf]
    %v278 = vld [vmem:[%s267 + $0x28] sm:$0xf]
    %v279 = vld [vmem:[%s267 + $0x2c] sm:$0xf]
    %v280 = vld [vmem:[%s267 + $0x30] sm:$0xf]
    %v281 = vld [vmem:[%s267 + $0x34] sm:$0xf]
    %v282 = vld [vmem:[%s267 + $0x38] sm:$0xf]
    %v283 = vld [vmem:[%s267 + $0x3c] sm:$0xf]
    %s284 = scalar_lea.vmem %s4, 4
    %v285 = vld [vmem:[%s284] sm:$0x7]
    %v286 = vlaneseq
    %v287 = vshrl.u32 %v286, 7
    %v288 = vsub.s32 0, %v287
    %v289 = vrot.slane %v285, %v288
    %v306 = vunpack.c.l.b16 %v268
    %v307 = vunpack.c.l.b16 %v269
    %v308 = vunpack.c.l.b16 %v270
    %v309 = vunpack.c.l.b16 %v271
    %v310 = vunpack.c.l.b16 %v272
    %v311 = vunpack.c.l.b16 %v273
    %v312 = vunpack.c.l.b16 %v274
    %v313 = vunpack.c.l.b16 %v275
    %v314 = vunpack.c.l.b16 %v276
    %v315 = vunpack.c.l.b16 %v277
    %v316 = vunpack.c.l.b16 %v278
    %v317 = vunpack.c.l.b16 %v279
    %v318 = vunpack.c.l.b16 %v280
    %v319 = vunpack.c.l.b16 %v281
    %v320 = vunpack.c.l.b16 %v282
    %v321 = vunpack.c.l.b16 %v283
    %v322 = vpack.c.b16 %v307, %v306
    %v323 = vpack.c.b16 %v309, %v308
    %v324 = vpack.c.b16 %v311, %v310
    %v325 = vpack.c.b16 %v313, %v312
    %v326 = vpack.c.b16 %v315, %v314
    %v327 = vpack.c.b16 %v317, %v316
    %v328 = vpack.c.b16 %v319, %v318
    %v329 = vpack.c.b16 %v321, %v320
    %338 = vmatprep.subr.bf16.mxu0 0
    %339 = vmatpush1.bf16.msra.mxu0 %v322
    %340 = vmatprep.subr.bf16.mxu0 0
    %341 = vmatpush1.bf16.msra.mxu0 %v323
    %342 = vmatprep.subr.bf16.mxu0 0
    %343 = vmatpush1.bf16.msra.mxu0 %v324
    %344 = vmatprep.subr.bf16.mxu0 0
    %345 = vmatpush1.bf16.msra.mxu0 %v325
    %346 = vmatprep.subr.bf16.mxu0 0
    %347 = vmatpush1.bf16.msra.mxu0 %v326
    %348 = vmatprep.subr.bf16.mxu0 0
    %349 = vmatpush1.bf16.msra.mxu0 %v327
    %350 = vmatprep.subr.bf16.mxu0 0
    %351 = vmatpush1.bf16.msra.mxu0 %v328
    %352 = vmatprep.subr.bf16.mxu0 0
    %353 = vmatpush1.bf16.msra.mxu0 %v329
    %354 = vmatprep.subr.bf16.mxu0 0
    %355 = vmatpush1.bf16.msra.mxu0 0
    %356 = vmatprep.subr.bf16.mxu0 0
    %357 = vmatpush1.bf16.msra.mxu0 0
    %358 = vmatprep.subr.bf16.mxu0 0
    %359 = vmatpush1.bf16.msra.mxu0 0
    %360 = vmatprep.subr.bf16.mxu0 0
    %361 = vmatpush1.bf16.msra.mxu0 0
    %362 = vmatprep.subr.bf16.mxu0 0
    %363 = vmatpush1.bf16.msra.mxu0 0
    %364 = vmatprep.subr.bf16.mxu0 0
    %365 = vmatpush1.bf16.msra.mxu0 0
    %366 = vmatprep.subr.bf16.mxu0 0
    %367 = vmatpush1.bf16.msra.mxu0 0
    %368 = vmatprep.subr.bf16.mxu0 0
    %369 = vmatpush1.bf16.msra.mxu0 0
    %370 = vmatprep.mubr.bf16.mxu0 0
    %371 = vmatmul.mubr.bf16.gmra.mrb[0].mxu0 %v266
    %v372 = vpop.f32.mrb[0].mxu0
    %v373 = vadd.f32 %v289, %v372
    %v374 = vpop.f32.mrb[0].mxu0
    %v375 = vpop.f32.mrb[0].mxu0
    %v376 = vpop.f32.mrb[0].mxu0
    %377 = vdwg.mxu0
    %v378 = vmul.f32 %v373, 0.01
    %v379 = vmax.f32 %v373, %v378
    %v380 = vrot.slane %v379, 4
    %v381 = vadd.f32 %v379, %v380
    %v382 = vrot.slane %v381, 2
    %v383 = vadd.f32 %v381, %v382
    %v384 = vrot.slane %v383, 1
    %v385 = vadd.f32 %v383, %v384
    %v386 = vmul.f32 %v385, %v237
    %v387 = vsub.f32 %v379, %v386
    %v388 = vmul.f32 %v387, %v387
    %v389 = vrot.slane %v388, 4
    %v390 = vadd.f32 %v388, %v389
    %v391 = vrot.slane %v390, 2
    %v392 = vadd.f32 %v390, %v391
    %v393 = vrot.slane %v392, 1
    %v394 = vadd.f32 %v392, %v393
    %v395 = vmul.f32 %v394, %v237
    %v396 = vadd.f32 %v395, 1e-05
    %v397 = vrsqrt.pop %v396
    %v398 = vmul.f32 %v285, %v397
    %v399 = vmul.f32 %v386, %v398
    %v401 = vrot.slane %v399, 7
    %v403 = vsub.f32 %v285, %v401
    %v404 = vlaneseq
    %v405 = vshrl.u32 %v404, 7
    %v406 = vsub.s32 1, %v405
    %v407 = vrot.slane %v398, %v406
    %v408 = vmul.f32 %v379, %v407
    %v409 = vlaneseq
    %v410 = vshrl.u32 %v409, 7
    %v411 = vsub.s32 2, %v410
    %v412 = vrot.slane %v403, %v411
    %v413 = vadd.f32 %v408, %v412
    %v414 = vpack.c.bf16 %v413, %v413
    %v415 = vld [vmem:[#allocation5] sm:$0xf]
    %v416 = vld [vmem:[#allocation5 + $0x4] sm:$0xf]
    %v417 = vld [vmem:[#allocation5 + $0x8] sm:$0xf]
    %v418 = vld [vmem:[#allocation5 + $0xc] sm:$0xf]
    %v419 = vld [vmem:[#allocation5 + $0x10] sm:$0xf]
    %v420 = vld [vmem:[#allocation5 + $0x14] sm:$0xf]
    %v421 = vld [vmem:[#allocation5 + $0x18] sm:$0xf]
    %v422 = vld [vmem:[#allocation5 + $0x1c] sm:$0xf]
    %v423 = vld [vmem:[#allocation5 + $0x20] sm:$0xf]
    %v424 = vld [vmem:[#allocation5 + $0x24] sm:$0xf]
    %v425 = vld [vmem:[#allocation5 + $0x28] sm:$0xf]
    %v426 = vld [vmem:[#allocation5 + $0x2c] sm:$0xf]
    %v427 = vld [vmem:[#allocation5 + $0x30] sm:$0xf]
    %v428 = vld [vmem:[#allocation5 + $0x34] sm:$0xf]
    %v429 = vld [vmem:[#allocation5 + $0x38] sm:$0xf]
    %v430 = vld [vmem:[#allocation5 + $0x3c] sm:$0xf]
    %v431 = vld [vmem:[%s6] sm:$0x1]
    %v433 = vlaneseq
    %v434 = vshrl.u32 %v433, 7
    %v435 = vsub.s32 0, %v434
    %v436 = vrot.slane %v431, %v435
    %v454 = vunpack.c.l.b16 %v415
    %v455 = vunpack.c.l.b16 %v416
    %v456 = vunpack.c.l.b16 %v417
    %v457 = vunpack.c.l.b16 %v418
    %v458 = vunpack.c.l.b16 %v419
    %v459 = vunpack.c.l.b16 %v420
    %v460 = vunpack.c.l.b16 %v421
    %v461 = vunpack.c.l.b16 %v422
    %v462 = vunpack.c.l.b16 %v423
    %v463 = vunpack.c.l.b16 %v424
    %v464 = vunpack.c.l.b16 %v425
    %v465 = vunpack.c.l.b16 %v426
    %v466 = vunpack.c.l.b16 %v427
    %v467 = vunpack.c.l.b16 %v428
    %v468 = vunpack.c.l.b16 %v429
    %v469 = vunpack.c.l.b16 %v430
    %v470 = vpack.c.b16 %v455, %v454
    %v471 = vpack.c.b16 %v457, %v456
    %v472 = vpack.c.b16 %v459, %v458
    %v473 = vpack.c.b16 %v461, %v460
    %v474 = vpack.c.b16 %v463, %v462
    %v475 = vpack.c.b16 %v465, %v464
    %v476 = vpack.c.b16 %v467, %v466
    %v477 = vpack.c.b16 %v469, %v468
    %486 = vmatprep.subr.bf16.mxu0 0
    %487 = vmatpush1.bf16.msra.mxu0 %v470
    %488 = vmatprep.subr.bf16.mxu0 0
    %489 = vmatpush1.bf16.msra.mxu0 %v471
    %490 = vmatprep.subr.bf16.mxu0 0
    %491 = vmatpush1.bf16.msra.mxu0 %v472
    %492 = vmatprep.subr.bf16.mxu0 0
    %493 = vmatpush1.bf16.msra.mxu0 %v473
    %494 = vmatprep.subr.bf16.mxu0 0
    %495 = vmatpush1.bf16.msra.mxu0 %v474
    %496 = vmatprep.subr.bf16.mxu0 0
    %497 = vmatpush1.bf16.msra.mxu0 %v475
    %498 = vmatprep.subr.bf16.mxu0 0
    %499 = vmatpush1.bf16.msra.mxu0 %v476
    %500 = vmatprep.subr.bf16.mxu0 0
    %501 = vmatpush1.bf16.msra.mxu0 %v477
    %502 = vmatprep.subr.bf16.mxu0 0
    %503 = vmatpush1.bf16.msra.mxu0 0
    %504 = vmatprep.subr.bf16.mxu0 0
    %505 = vmatpush1.bf16.msra.mxu0 0
    %506 = vmatprep.subr.bf16.mxu0 0
    %507 = vmatpush1.bf16.msra.mxu0 0
    %508 = vmatprep.subr.bf16.mxu0 0
    %509 = vmatpush1.bf16.msra.mxu0 0
    %510 = vmatprep.subr.bf16.mxu0 0
    %511 = vmatpush1.bf16.msra.mxu0 0
    %512 = vmatprep.subr.bf16.mxu0 0
    %513 = vmatpush1.bf16.msra.mxu0 0
    %514 = vmatprep.subr.bf16.mxu0 0
    %515 = vmatpush1.bf16.msra.mxu0 0
    %516 = vmatprep.subr.bf16.mxu0 0
    %517 = vmatpush1.bf16.msra.mxu0 0
    %518 = vmatprep.mubr.bf16.mxu0 0
    %519 = vmatmul.mubr.bf16.gmra.mrb[0].mxu0 %v414
    %v520 = vpop.f32.mrb[0].mxu0
    %v521 = vadd.f32 %v436, %v520
    %v522 = vpop.f32.mrb[0].mxu0
    %v523 = vpop.f32.mrb[0].mxu0
    %v524 = vpop.f32.mrb[0].mxu0
    %525 = vdwg.mxu0
    %526 = vst [vmem:[#allocation7] sm:$0xff] %v521
    // Predicated region
    $region38: #{tpu_custom_call.1} parent=1 // pred_check
      _
    $region39: #{tpu_custom_call.1} parent=1 // pred_check_branch
      %528 = sbr.rel (0) target = $region41
    $region40: #{tpu_custom_call.1} parent=1 // pred_region
      %s530 = ssub.s32 128, 128
      %531 = vsyncadd [#allocation4], %s530
      %s533 = sshll.u32 [#allocation7], 4
      %s534 = int_to_ptr.vmem [resolvable:$true] %s533
      %536 = dma.vmem_to_hbm [thread:$0]  %s534, 128, %s7, [#allocation4]
    $region41: #{tpu_custom_call.1} parent=1 // pred_fallthru
      _
    // Predicated region
    $region42: #{tpu_custom_call.1} parent=1 // pred_check
      _
    $region43: #{tpu_custom_call.1} parent=1 // pred_check_branch
      %538 = sbr.rel (0) target = $region45
    $region44: #{tpu_custom_call.1} parent=1 // pred_region
      %539 = dma.done [#allocation4], 128
    $region45: #{tpu_custom_call.1} parent=1 // pred_fallthru
      _
    %540 = vsyncpa [#allocation3], 1
    %541 = vsyncpa [#allocation6], 1
    %542 = vsyncpa [#allocation4], 1

</llo_original>
